<compile_context>
chip_gen: v6e
topology: v6e:2x2x1
jax: 0.10.0
libtpu: 0.0.40
codegen_flags: <defaults>
</compile_context>

<pallas_src>
import functools

import jax
import jax.numpy as jnp
from jax.experimental import pallas as pl
from jax.experimental.pallas import tpu as pltpu

F_BAND = 128  # lane band reserved per linear child (lane-dense stores/slices)


def _round_up(v, m):
    return (v + m - 1) // m * m


def fuse_linear_params(w1, b1, w2, b2, param_dtype=None):
    """One-time parameter fusion (hoisted out of the forward path).

    w1/w2: [f_in, f_out_i] (transposed from nn.Linear's [out, in]); b_i: [1, f_out_i].
    Each child's weight/bias is zero-padded into its own 128-lane band so the
    per-child outputs fall on lane-0/128 boundaries.  Zero padding keeps the
    real output columns bit-identical.  Bias stays f32 for the f32 epilogue.
    """
    f_in, f_out1 = w1.shape
    _, f_out2 = w2.shape
    assert f_out1 <= F_BAND and f_out2 <= F_BAND, "child out-features must fit one lane band"
    w = jnp.concatenate(
        [jnp.pad(w1, ((0, 0), (0, F_BAND - f_out1))),
         jnp.pad(w2, ((0, 0), (0, F_BAND - f_out2)))], axis=1)      # [f_in, 256]
    b = jnp.concatenate(
        [jnp.pad(b1, ((0, 0), (0, F_BAND - f_out1))),
         jnp.pad(b2, ((0, 0), (0, F_BAND - f_out2)))], axis=1)      # [1, 256]
    if param_dtype is not None:
        # Optional bf16 weights: at K=32 the kernel is HBM-bound on every
        # generation, so halving weight/input bytes ~halves the dominant cost.
        w = w.astype(param_dtype)
    return w, b.astype(jnp.float32)


def _fused_fanout_kernel(x_ref, w_ref, b_ref, o1_ref, o2_ref):
    # One shared-input load, ONE fused MXU matmul over both children's weight
    # bands, one fused f32 bias add (safe on v5e: no bf16 VPU), then two
    # lane-dense (128-wide) stores -- one per child.
    acc = jnp.dot(x_ref[...], w_ref[...], preferred_element_type=jnp.float32)
    acc = acc + b_ref[...]
    o1_ref[...] = acc[:, :F_BAND].astype(o1_ref.dtype)   # lane-128-aligned split
    o2_ref[...] = acc[:, F_BAND:].astype(o2_ref.dtype)


def _choose_tile_m(n):
    # Big tiles amortize the ~0.35 us/grid-step overhead (measured sweet spot
    # 512-1024 rows); for smaller batches we instead aim for >=2 grid steps so
    # v7x's second TensorCore isn't idle (no-op on single-TC v5e/v6e).
    if n <= 8:
        return 8
    tm = min(512, _round_up(n, 8))
    if pl.cdiv(n, tm) < 2:
        tm = max(8, _round_up(pl.cdiv(n, 2), 8))
    return tm


def multi_single_input_forward(x, w_fused, b_fused, const_tensor, f_out1, f_out2):
    """Pallas equivalent of MultiSingleInputModule(linear1, linear2, const)(x).

    Returns (linear1(x), linear2(x), const), matching the PyTorch forward,
    which returns a tuple of each child's output on the shared input.
    Expects pre-fused parameters from `fuse_linear_params` (hoisted fusion).
    """
    n, f_in = x.shape
    f_pad = w_fused.shape[1]            # 2 * F_BAND
    out_dtype = x.dtype

    # Remainder-safe batch tiling: pad rows to a multiple of the M tile.
    tm = _choose_tile_m(n)
    n_blocks = pl.cdiv(n, tm)
    n_pad = n_blocks * tm
    x_p = jnp.pad(x, ((0, n_pad - n), (0, 0))) if n_pad != n else x

    # Advisory cost hint so XLA schedules this tiny custom call sensibly.
    cost = pl.CostEstimate(
        flops=2 * n_pad * f_in * f_pad,
        transcendentals=0,
        bytes_accessed=(x_p.size * x_p.dtype.itemsize
                        + w_fused.size * w_fused.dtype.itemsize
                        + b_fused.size * b_fused.dtype.itemsize
                        + 2 * n_pad * F_BAND * jnp.dtype(out_dtype).itemsize),
    )

    y1p, y2p = pl.pallas_call(
        _fused_fanout_kernel,
        out_shape=(jax.ShapeDtypeStruct((n_pad, F_BAND), out_dtype),
                   jax.ShapeDtypeStruct((n_pad, F_BAND), out_dtype)),
        grid=(n_blocks,),
        in_specs=[
            pl.BlockSpec((tm, f_in), lambda i: (i, 0)),      # shared input tile
            pl.BlockSpec((f_in, f_pad), lambda i: (0, 0)),   # fused weights (resident)
            pl.BlockSpec((1, f_pad), lambda i: (0, 0)),      # fused bias   (resident)
        ],
        out_specs=(
            pl.BlockSpec((tm, F_BAND), lambda i: (i, 0)),    # child-0 band, lane-dense
            pl.BlockSpec((tm, F_BAND), lambda i: (i, 0)),    # child-1 band, lane-dense
        ),
        compiler_params=pltpu.CompilerParams(
            dimension_semantics=("parallel",)),
        cost_estimate=cost,
    )(x_p, w_fused, b_fused)

    # Lane-0-aligned slices (near-free); drop any batch padding rows.
    y1 = y1p[:n, :f_out1]
    y2 = y2p[:n, :f_out2]

    # The Lambda-wrapped tensor child simply returns the stored constant.
    return (y1, y2, const_tensor)


if __name__ == "__main__":
    key = jax.random.PRNGKey(0)
    k_x, k_w1, k_b1, k_w2, k_b2, k_c = jax.random.split(key, 6)

    batch, f_in, f_out = 16, 32, 32   # batch=16 -> grid of 2 (both v7x TCs busy)

    x = jax.random.normal(k_x, (batch, f_in), dtype=jnp.float32)

    # Synthetic nn.Linear(32, 32) parameters, stored transposed [in, out].
    w1 = jax.random.normal(k_w1, (f_in, f_out), dtype=jnp.float32) * 0.1
    b1 = jax.random.normal(k_b1, (1, f_out), dtype=jnp.float32) * 0.1
    w2 = jax.random.normal(k_w2, (f_in, f_out), dtype=jnp.float32) * 0.1
    b2 = jax.random.normal(k_b2, (1, f_out), dtype=jnp.float32) * 0.1

    # Constant-tensor child (wrapped in Lambda in the PyTorch module):
    # returned as-is regardless of the input.
    const_tensor = jax.random.normal(k_c, (batch, f_out), dtype=jnp.float32)

    # --- Hoisted, one-time parameter fusion (not in the per-call path). -----
    w_fused, b_fused = fuse_linear_params(w1, b1, w2, b2)

    fwd = jax.jit(functools.partial(multi_single_input_forward,
                                    f_out1=f_out, f_out2=f_out))
    outs = fwd(x, w_fused, b_fused, const_tensor)
    outs = jax.block_until_ready(outs)

    # Correctness check against plain-JAX reference of the same forward.
    ref1 = x @ w1 + b1
    ref2 = x @ w2 + b2
    assert isinstance(outs, tuple) and len(outs) == 3
    assert jnp.allclose(outs[0], ref1, atol=1e-5, rtol=1e-5)
    assert jnp.allclose(outs[1], ref2, atol=1e-5, rtol=1e-5)
    assert jnp.array_equal(outs[2], const_tensor)

    print("KERNEL_OK")
</pallas_src>

<mosaic_0001>
module attributes {stable_mosaic.version = 11 : i64} {
  func.func @_fused_fanout_kernel(%arg0: i32, %arg1: memref<8x32xf32, #tpu.memory_space<vmem>>, %arg2: memref<32x256xf32, #tpu.memory_space<vmem>>, %arg3: memref<1x256xf32, #tpu.memory_space<vmem>>, %arg4: memref<8x128xf32, #tpu.memory_space<vmem>>, %arg5: memref<8x128xf32, #tpu.memory_space<vmem>>) attributes {dimension_semantics = [#tpu.dimension_semantics<parallel>], iteration_bounds = array<i64: 2>, scalar_prefetch = 0 : i64, scratch_operands = 0 : i64, tpu.core_type = #tpu.core_type<tc>, window_params = [{transform_indices = @transform_0, window_bounds = array<i64: 8, 32>}, {pipeline_mode = #tpu.pipeline_mode<synchronous>, transform_indices = @transform_1, window_bounds = array<i64: 32, 256>}, {pipeline_mode = #tpu.pipeline_mode<synchronous>, transform_indices = @transform_2, window_bounds = array<i64: 1, 256>}, {transform_indices = @transform_3, window_bounds = array<i64: 8, 128>}, {transform_indices = @transform_4, window_bounds = array<i64: 8, 128>}]} {
    %c0 = arith.constant 0 : index
    %c0_0 = arith.constant 0 : index
    %0 = vector.load %arg1[%c0, %c0_0] : memref<8x32xf32, #tpu.memory_space<vmem>>, vector<8x32xf32>
    %c0_1 = arith.constant 0 : index
    %c0_2 = arith.constant 0 : index
    %1 = vector.load %arg2[%c0_1, %c0_2] : memref<32x256xf32, #tpu.memory_space<vmem>>, vector<32x256xf32>
    %cst = arith.constant dense<0.000000e+00> : vector<8x256xf32>
    %2 = tpu.matmul %0, %1, %cst {dimension_numbers = #tpu.dot_dimension_numbers<[1], [0], [0], [1], [0, 0, 1, 1], [], []>} : vector<8x32xf32>, vector<32x256xf32>, vector<8x256xf32> -> vector<8x256xf32>
    %c0_3 = arith.constant 0 : index
    %c0_4 = arith.constant 0 : index
    %3 = vector.load %arg3[%c0_3, %c0_4] : memref<1x256xf32, #tpu.memory_space<vmem>>, vector<1x256xf32>
    %4 = vector.broadcast %3 : vector<1x256xf32> to vector<8x256xf32>
    %5 = arith.addf %2, %4 : vector<8x256xf32>
    %6 = vector.extract_strided_slice %5 {offsets = [0, 0], sizes = [8, 128], strides = [1, 1]} : vector<8x256xf32> to vector<8x128xf32>
    %c0_5 = arith.constant 0 : index
    %c0_6 = arith.constant 0 : index
    %7 = vector.load %arg4[%c0_5, %c0_6] : memref<8x128xf32, #tpu.memory_space<vmem>>, vector<8x128xf32>
    tpu.vector_store %arg4[%c0_5, %c0_6], %6 {strides = array<i32>} : memref<8x128xf32, #tpu.memory_space<vmem>>, vector<8x128xf32>,
    %8 = vector.extract_strided_slice %5 {offsets = [0, 128], sizes = [8, 128], strides = [1, 1]} : vector<8x256xf32> to vector<8x128xf32>
    %c0_7 = arith.constant 0 : index
    %c0_8 = arith.constant 0 : index
    %9 = vector.load %arg5[%c0_7, %c0_8] : memref<8x128xf32, #tpu.memory_space<vmem>>, vector<8x128xf32>
    tpu.vector_store %arg5[%c0_7, %c0_8], %8 {strides = array<i32>} : memref<8x128xf32, #tpu.memory_space<vmem>>, vector<8x128xf32>,
    return
  }
  func.func @transform_0(%arg0: i32) -> (i32, i32) {
    %c0_i32 = arith.constant 0 : i32
    %c0_i32_0 = arith.constant 0 : i32
    return %arg0, %c0_i32 : i32, i32
  }
  func.func @transform_1(%arg0: i32) -> (i32, i32) {
    %c0_i32 = arith.constant 0 : i32
    %c0_i32_0 = arith.constant 0 : i32
    %c0_i32_1 = arith.constant 0 : i32
    return %c0_i32, %c0_i32_0 : i32, i32
  }
  func.func @transform_2(%arg0: i32) -> (i32, i32) {
    %c0_i32 = arith.constant 0 : i32
    %c0_i32_0 = arith.constant 0 : i32
    %c0_i32_1 = arith.constant 0 : i32
    return %c0_i32, %c0_i32_0 : i32, i32
  }
  func.func @transform_3(%arg0: i32) -> (i32, i32) {
    %c0_i32 = arith.constant 0 : i32
    %c0_i32_0 = arith.constant 0 : i32
    return %arg0, %c0_i32 : i32, i32
  }
  func.func @transform_4(%arg0: i32) -> (i32, i32) {
    %c0_i32 = arith.constant 0 : i32
    %c0_i32_0 = arith.constant 0 : i32
    return %arg0, %c0_i32 : i32, i32
  }
}

</mosaic_0001>

<llo_original>
// kernel: multi_single_input_forward.1
$region0: #{multi_single_input_forward.1}
  #allocation0 [shape = 'u32[]', space=smem, size = 0x4, offset = 0x4, fixed_abs, tag = 'smem constant byte address 0x4 - core index']
  #allocation1 [shape = 'u32[144,128]{1,0:T(1,128)}', space=vmem, size = 0x12000, scoped, tag = 'internal scratch']
  %s0 = inlined_call_operand.hbm [shape: f32[16,32], index: 0, kind: input, shape index: {}]
  %s1 = inlined_call_operand.hbm [shape: f32[32,256], index: 1, kind: input, shape index: {}]
  %s2 = inlined_call_operand.vmem [shape: f32[1,256], index: 2, kind: input, shape index: {}]
  %s3 = inlined_call_operand.hbm [shape: f32[16,128], index: 3, kind: output, shape index: {0}]
  %s4 = inlined_call_operand.hbm [shape: f32[16,128], index: 4, kind: output, shape index: {1}]
  %5 = xla_tuple %s3, %s4
  %s6 = sld [smem:[#allocation0]]
  $region61: #{multi_single_input_forward.1} parent=0
    _
  %s8 = ssub.s32 1, %s6
  %s9 = scalar_select 0, %s8, %s6
  $region1: #{multi_single_input_forward.1} parent=0
    #allocation2 [shape = 'u8[8192]{0}', space=vmem, size = 0x2000, scoped, tag = 'input window, operand 0']
    #allocation3 [shape = 's32[2]{0}', space=sflag, size = 0x8, scoped, tag = 'scoped memory for multi_single_input_forward.1']
    #allocation4 [shape = 's32[2]{0}', space=sflag, size = 0x8, scoped, tag = 'scoped memory for multi_single_input_forward.1']
    #allocation5 [shape = 'u8[32768]{0}', space=vmem, size = 0x8000, scoped, tag = 'input window, operand 1, single buffered']
    #allocation6 [shape = 's32[1]{0}', space=sflag, size = 0x4, scoped, tag = 'scoped memory for multi_single_input_forward.1']
    #allocation7 [shape = 'u8[8192]{0}', space=vmem, size = 0x2000, scoped, tag = 'output window, operand 0']
    #allocation8 [shape = 'u8[8192]{0}', space=vmem, size = 0x2000, scoped, tag = 'output window, operand 1']
    #allocation9 [shape = 's32[2]{0}', space=sflag, size = 0x8, scoped, tag = 'scoped memory for multi_single_input_forward.1']
    %10 = vsyncpa [#allocation3], 0
    %s11 = scalar_lea.sflag [#allocation3], 1
    %12 = vsyncpa %s11, 0
    %13 = vsyncpa [#allocation6], 0
    %14 = vsyncpa [#allocation4], 0
    %s15 = scalar_lea.sflag [#allocation4], 1
    %16 = vsyncpa %s15, 0
    %17 = vsyncpa [#allocation9], 0
    %s18 = scalar_lea.sflag [#allocation9], 1
    %19 = vsyncpa %s18, 0
    loop: start=0, step=1, limit=4
    $region2: #{multi_single_input_forward.1} parent=1 // loop_pre_header
      _
    $region3: #{multi_single_input_forward.1} parent=1 // loop_header
      %s21 = sphi 0, %s25
      %p22 = scmp.ge.s32.totalorder %s21, 4
      %s31 = sphi 0, %s33
      %s34 = sphi 0, %s31
      %s35 = sphi 0, %s34
      %s51 = sphi 0, %s35
      %s55 = sphi 0, %s55
      %s57 = sphi 0, %s55
      %s58 = sphi 0, %s57
      %s72 = sphi 0, %s58
      %s76 = sphi 0, %s76
      %s78 = sphi 0, %s76
      %s79 = sphi 0, %s78
      %s93 = sphi 0, %s79
      %s99 = sphi 0, %s101
      %s102 = sphi 0, %s99
      %s103 = sphi 0, %s102
      %s119 = sphi 0, %s103
      %s125 = sphi 0, %s127
      %s128 = sphi 0, %s125
      %s129 = sphi 0, %s128
      %s145 = sphi 0, %s129
    $region4: #{multi_single_input_forward.1} parent=1 // loop_header_branch
      %24 = sbr.rel (%p22) target = $region8
    $region5: #{multi_single_input_forward.1} parent=1 // loop_body
      %s26 = ssub.s32 %s21, 1
      %s27 = ssub.s32 %s21, 2
      %s28 = sadd.s32 %s21, 1
      %s29 = ssub.s32 %s21, %s28
      %p30 = scmp.eq.s32.totalorder %s29, 0
      %s32 = sadd.s32 %s31, 1
      %s33 = scalar_select %p30, %s31, %s32
      %p36 = pneg %p30
      %p37 = scmp.eq.s32.totalorder %s21, 1
      %p38 = por %p36, %p37
      %p39 = scmp.ne.s32.totalorder %s31, %s34
      %p40 = scmp.eq.s32.totalorder %s21, 0
      %p41 = por %p39, %p40
      %p42 = scmp.ne.s32.totalorder %s31, %s34
      %p43 = scmp.eq.s32.totalorder %s26, 1
      %p44 = por %p42, %p43
      %p45 = scmp.ne.s32.totalorder %s34, %s35
      %p46 = scmp.eq.s32.totalorder %s26, 0
      %p47 = por %p45, %p46
      %p48 = scmp.ne.s32.totalorder %s34, %s35
      %p49 = scmp.eq.s32.totalorder %s27, 1
      %p50 = por %p48, %p49
      %p52 = scmp.ne.s32.totalorder %s35, %s51
      %p53 = scmp.eq.s32.totalorder %s27, 0
      %p54 = por %p52, %p53
      %s56 = sadd.s32 %s55, 1
      %p59 = scmp.eq.s32.totalorder %s21, 1
      %p60 = scmp.ne.s32.totalorder %s55, %s57
      %p61 = scmp.eq.s32.totalorder %s21, 0
      %p62 = por %p60, %p61
      %p63 = scmp.ne.s32.totalorder %s55, %s57
      %p64 = scmp.eq.s32.totalorder %s26, 1
      %p65 = por %p63, %p64
      %p66 = scmp.ne.s32.totalorder %s57, %s58
      %p67 = scmp.eq.s32.totalorder %s26, 0
      %p68 = por %p66, %p67
      %p69 = scmp.ne.s32.totalorder %s57, %s58
      %p70 = scmp.eq.s32.totalorder %s27, 1
      %p71 = por %p69, %p70
      %p73 = scmp.ne.s32.totalorder %s58, %s72
      %p74 = scmp.eq.s32.totalorder %s27, 0
      %p75 = por %p73, %p74
      %s77 = sadd.s32 %s76, 1
      %p80 = scmp.eq.s32.totalorder %s21, 1
      %p81 = scmp.ne.s32.totalorder %s76, %s78
      %p82 = scmp.eq.s32.totalorder %s21, 0
      %p83 = por %p81, %p82
      %p84 = scmp.ne.s32.totalorder %s76, %s78
      %p85 = scmp.eq.s32.totalorder %s26, 1
      %p86 = por %p84, %p85
      %p87 = scmp.ne.s32.totalorder %s78, %s79
      %p88 = scmp.eq.s32.totalorder %s26, 0
      %p89 = por %p87, %p88
      %p90 = scmp.ne.s32.totalorder %s78, %s79
      %p91 = scmp.eq.s32.totalorder %s27, 1
      %p92 = por %p90, %p91
      %p94 = scmp.ne.s32.totalorder %s79, %s93
      %p95 = scmp.eq.s32.totalorder %s27, 0
      %p96 = por %p94, %p95
      %s97 = ssub.s32 %s21, %s28
      %p98 = scmp.eq.s32.totalorder %s97, 0
      %s100 = sadd.s32 %s99, 1
      %s101 = scalar_select %p98, %s99, %s100
      %p104 = pneg %p98
      %p105 = scmp.eq.s32.totalorder %s21, 1
      %p106 = por %p104, %p105
      %p107 = scmp.ne.s32.totalorder %s99, %s102
      %p108 = scmp.eq.s32.totalorder %s21, 0
      %p109 = por %p107, %p108
      %p110 = scmp.ne.s32.totalorder %s99, %s102
      %p111 = scmp.eq.s32.totalorder %s26, 1
      %p112 = por %p110, %p111
      %p113 = scmp.ne.s32.totalorder %s102, %s103
      %p114 = scmp.eq.s32.totalorder %s26, 0
      %p115 = por %p113, %p114
      %p116 = scmp.ne.s32.totalorder %s102, %s103
      %p117 = scmp.eq.s32.totalorder %s27, 1
      %p118 = por %p116, %p117
      %p120 = scmp.ne.s32.totalorder %s103, %s119
      %p121 = scmp.eq.s32.totalorder %s27, 0
      %p122 = por %p120, %p121
      %s123 = ssub.s32 %s21, %s28
      %p124 = scmp.eq.s32.totalorder %s123, 0
      %s126 = sadd.s32 %s125, 1
      %s127 = scalar_select %p124, %s125, %s126
      %p130 = pneg %p124
      %p131 = scmp.eq.s32.totalorder %s21, 1
      %p132 = por %p130, %p131
      %p133 = scmp.ne.s32.totalorder %s125, %s128
      %p134 = scmp.eq.s32.totalorder %s21, 0
      %p135 = por %p133, %p134
      %p136 = scmp.ne.s32.totalorder %s125, %s128
      %p137 = scmp.eq.s32.totalorder %s26, 1
      %p138 = por %p136, %p137
      %p139 = scmp.ne.s32.totalorder %s128, %s129
      %p140 = scmp.eq.s32.totalorder %s26, 0
      %p141 = por %p139, %p140
      %p142 = scmp.ne.s32.totalorder %s128, %s129
      %p143 = scmp.eq.s32.totalorder %s27, 1
      %p144 = por %p142, %p143
      %p146 = scmp.ne.s32.totalorder %s129, %s145
      %p147 = scmp.eq.s32.totalorder %s27, 0
      %p148 = por %p146, %p147
      %p149 = scmp.le.s32.totalorder 1, %s21
      %p150 = scmp.lt.s32.totalorder %s21, 3
      %p151 = pnand %p149, %p150
      %p152 = pneg %p151
      // Predicated region
      $region9: #{multi_single_input_forward.1} parent=5 // pred_check
        _
      $region10: #{multi_single_input_forward.1} parent=5 // pred_check_branch
        %154 = sbr.rel (%p151) target = $region12
      $region11: #{multi_single_input_forward.1} parent=5 // pred_region
        %s155 = ssub.s32 %s21, 1
        // Predicated region
        $region13: #{multi_single_input_forward.1} parent=11 // pred_check
          %p156 = pneg %p68
        $region14: #{multi_single_input_forward.1} parent=11 // pred_check_branch
          %158 = sbr.rel (%p156) target = $region16
        $region15: #{multi_single_input_forward.1} parent=11 // pred_region
          %s160 = ssub.s32 1024, 1024
          %161 = vsyncadd [#allocation6], %s160
          %s162 = sshll.u32 [#allocation5], 4
          %s163 = int_to_ptr.vmem [resolvable:$true] %s162
          %168 = dma.hbm_to_vmem [thread:$0]  %s1, 1024, %s163, [#allocation6], 256, 256, 16
        $region16: #{multi_single_input_forward.1} parent=11 // pred_fallthru
          _
        // Predicated region
        $region17: #{multi_single_input_forward.1} parent=11 // pred_check
          %p169 = pneg %p89
        $region18: #{multi_single_input_forward.1} parent=11 // pred_check_branch
          %171 = sbr.rel (%p169) target = $region20
        $region19: #{multi_single_input_forward.1} parent=11 // pred_region
          _
        $region20: #{multi_single_input_forward.1} parent=11 // pred_fallthru
          _
      $region12: #{multi_single_input_forward.1} parent=5 // pred_fallthru
        _
      %p172 = scmp.lt.s32.totalorder %s21, 2
      // Predicated region
      $region21: #{multi_single_input_forward.1} parent=5 // pred_check
        %p173 = pneg %p172
      $region22: #{multi_single_input_forward.1} parent=5 // pred_check_branch
        %175 = sbr.rel (%p173) target = $region24
      $region23: #{multi_single_input_forward.1} parent=5 // pred_region
        // Predicated region
        $region25: #{multi_single_input_forward.1} parent=23 // pred_check
          %p176 = pneg %p41
        $region26: #{multi_single_input_forward.1} parent=23 // pred_check_branch
          %178 = sbr.rel (%p176) target = $region28
        $region27: #{multi_single_input_forward.1} parent=23 // pred_region
          %s179 = sand.u32 %s31, 1
          %s180 = scalar_lea.sflag [#allocation3], %s179
          %s181 = sand.u32 %s31, 1
          %s182 = smul.addr %s181, 8
          %s183 = scalar_lea.vmem [#allocation2], %s182
          %s185 = ssub.s32 128, 128
          %186 = vsyncadd %s180, %s185
          %s187 = smul.addr %s21, 128
          %s188 = scalar_lea.hbm %s0, %s187
          %s190 = sshll.u32 %s183, 4
          %s191 = int_to_ptr.vmem [resolvable:$true] %s190
          %193 = dma.hbm_to_vmem [thread:$0]  %s188, 128, %s191, %s180
        $region28: #{multi_single_input_forward.1} parent=23 // pred_fallthru
          _
      $region24: #{multi_single_input_forward.1} parent=5 // pred_fallthru
        _
      %p194 = scmp.le.s32.totalorder 1, %s21
      %p195 = scmp.lt.s32.totalorder %s21, 3
      %p196 = pnand %p194, %p195
      %p197 = pneg %p196
      // Predicated region
      $region29: #{multi_single_input_forward.1} parent=5 // pred_check
        _
      $region30: #{multi_single_input_forward.1} parent=5 // pred_check_branch
        %199 = sbr.rel (%p196) target = $region32
      $region31: #{multi_single_input_forward.1} parent=5 // pred_region
        %s200 = ssub.s32 %s21, 1
        %s201 = sand.u32 %s34, 1
        %s202 = scalar_lea.sflag [#allocation3], %s201
        %s203 = sand.u32 %s34, 1
        %s204 = smul.addr %s203, 8
        %s205 = scalar_lea.vmem [#allocation2], %s204
        // Predicated region
        $region33: #{multi_single_input_forward.1} parent=31 // pred_check
          %p206 = pneg %p47
        $region34: #{multi_single_input_forward.1} parent=31 // pred_check_branch
          %208 = sbr.rel (%p206) target = $region36
        $region35: #{multi_single_input_forward.1} parent=31 // pred_region
          %209 = dma.done %s202, 128
        $region36: #{multi_single_input_forward.1} parent=31 // pred_fallthru
          _
        // Predicated region
        $region37: #{multi_single_input_forward.1} parent=31 // pred_check
          %p210 = pneg %p68
        $region38: #{multi_single_input_forward.1} parent=31 // pred_check_branch
          %212 = sbr.rel (%p210) target = $region40
        $region39: #{multi_single_input_forward.1} parent=31 // pred_region
          %213 = dma.done [#allocation6], 1024
        $region40: #{multi_single_input_forward.1} parent=31 // pred_fallthru
          _
        %s214 = sand.u32 %s34, 1
        %s215 = scalar_lea.sflag [#allocation3], %s214
        %s216 = sand.u32 %s34, 1
        %s217 = smul.addr %s216, 8
        %s218 = scalar_lea.vmem [#allocation2], %s217
        %p219 = pneg %p47
        %p220 = pneg %p44
        %p221 = pneg %p68
        %p222 = pneg %p65
        %p223 = pneg %p89
        %p224 = pneg %p86
        %p225 = pneg %p115
        %p226 = pneg %p112
        %s227 = sand.u32 %s102, 1
        %s228 = scalar_lea.sflag [#allocation4], %s227
        %s229 = sand.u32 %s102, 1
        %s230 = smul.addr %s229, 8
        %s231 = scalar_lea.vmem [#allocation7], %s230
        %p232 = pneg %p141
        %p233 = pneg %p138
        %s234 = sand.u32 %s128, 1
        %s235 = scalar_lea.sflag [#allocation9], %s234
        %s236 = sand.u32 %s128, 1
        %s237 = smul.addr %s236, 8
        %s238 = scalar_lea.vmem [#allocation8], %s237
        %v239 = vld [vmem:[%s205] sm:$0xff]
        %v240 = vld [vmem:[#allocation5] sm:$0xff]
        %v241 = vld [vmem:[#allocation5 + $0x8] sm:$0xff]
        %v242 = vld [vmem:[#allocation5 + $0x10] sm:$0xff]
        %v243 = vld [vmem:[#allocation5 + $0x18] sm:$0xff]
        %v244 = vld [vmem:[#allocation5 + $0x20] sm:$0xff]
        %v245 = vld [vmem:[#allocation5 + $0x28] sm:$0xff]
        %v246 = vld [vmem:[#allocation5 + $0x30] sm:$0xff]
        %v247 = vld [vmem:[#allocation5 + $0x38] sm:$0xff]
        %v248 = vld [vmem:[%s2] sm:$0x3]
        %v250 = vlaneseq
        %v251 = vshrl.u32 %v250, 7
        %v252 = vsub.s32 0, %v251
        %v253 = vrot.slane %v248, %v252
        %v254 = vlaneseq
        %v255 = vshrl.u32 %v254, 7
        %v256 = vsub.s32 1, %v255
        %v257 = vrot.slane %v248, %v256
        %vm260 = vcmask 261120
        %v262 = vsel %vm260, %v239, 0
        %264 = vmatprep.subr.mxu0 0.0
        %265 = vmatpush1.msra.mxu0 0.0
        %266 = vmatprep.subr.mxu0 0.0
        %267 = vmatpush1.msra.mxu0 0.0
        %268 = vmatprep.subr.mxu0 0.0
        %269 = vmatpush1.msra.mxu0 0.0
        %270 = vmatprep.subr.mxu0 0.0
        %271 = vmatpush1.msra.mxu0 0.0
        %272 = vmatprep.subr.mxu0 0.0
        %273 = vmatpush1.msra.mxu0 0.0
        %274 = vmatprep.subr.mxu0 0.0
        %275 = vmatpush1.msra.mxu0 0.0
        %276 = vmatprep.subr.mxu0 0.0
        %277 = vmatpush1.msra.mxu0 0.0
        %278 = vmatprep.subr.mxu0 0.0
        %279 = vmatpush1.msra.mxu0 0.0
        %280 = vmatprep.subr.mxu0 0.0
        %281 = vmatpush1.msra.mxu0 0.0
        %282 = vmatprep.subr.mxu0 0.0
        %283 = vmatpush1.msra.mxu0 0.0
        %284 = vmatprep.subr.mxu0 0.0
        %285 = vmatpush1.msra.mxu0 0.0
        %286 = vmatprep.subr.mxu0 0.0
        %287 = vmatpush1.msra.mxu0 0.0
        %288 = vmatprep.subr.mxu0 %v247
        %289 = vmatpush1.msra.mxu0 %v246
        %290 = vmatprep.subr.mxu0 %v245
        %291 = vmatpush1.msra.mxu0 %v244
        %292 = vmatprep.subr.mxu0 %v243
        %293 = vmatpush1.msra.mxu0 %v242
        %294 = vmatprep.subr.mxu0 %v241
        %295 = vmatpush1.msra.mxu0 %v240
        %296 = vmatprep.subr.mxu0 0.0
        %297 = vmatpush2.msra.mxu0 0.0
        %298 = vmatprep.subr.mxu0 0.0
        %299 = vmatpush2.msra.mxu0 0.0
        %300 = vmatprep.subr.mxu0 0.0
        %301 = vmatpush2.msra.mxu0 0.0
        %302 = vmatprep.subr.mxu0 0.0
        %303 = vmatpush2.msra.mxu0 0.0
        %304 = vmatprep.subr.mxu0 0.0
        %305 = vmatpush2.msra.mxu0 0.0
        %306 = vmatprep.subr.mxu0 0.0
        %307 = vmatpush2.msra.mxu0 0.0
        %308 = vmatprep.subr.mxu0 0.0
        %309 = vmatpush2.msra.mxu0 0.0
        %310 = vmatprep.subr.mxu0 0.0
        %311 = vmatpush2.msra.mxu0 0.0
        %312 = vmatprep.subr.mxu0 0.0
        %313 = vmatpush2.msra.mxu0 0.0
        %314 = vmatprep.subr.mxu0 0.0
        %315 = vmatpush2.msra.mxu0 0.0
        %316 = vmatprep.subr.mxu0 0.0
        %317 = vmatpush2.msra.mxu0 0.0
        %318 = vmatprep.subr.mxu0 0.0
        %319 = vmatpush2.msra.mxu0 0.0
        %320 = vmatprep.subr.mxu0 0.0
        %321 = vmatpush2.msra.mxu0 0.0
        %322 = vmatprep.subr.mxu0 0.0
        %323 = vmatpush2.msra.mxu0 0.0
        %324 = vmatprep.subr.mxu0 0.0
        %325 = vmatpush2.msra.mxu0 0.0
        %326 = vmatprep.subr.mxu0 0.0
        %327 = vmatpush2.msra.mxu0 0.0
        %328 = vmatprep.mubr.f32.mxu0 0.0
        %329 = vmatmul.mubr.f32.gmra.mxu0 %v262
        %v330 = vpop.f32.mrf.mxu0
        %v331 = vadd.f32 %v253, %v330
        %v332 = vpop.f32.mrf.mxu0
        %v333 = vadd.f32 %v257, %v332
        %334 = vdwg.mxu0
        %335 = vst [vmem:[%s231] sm:$0xff] %v331
        %336 = vst [vmem:[%s238] sm:$0xff] %v333
        %s337 = sand.u32 %s102, 1
        %s338 = scalar_lea.sflag [#allocation4], %s337
        %s339 = sand.u32 %s102, 1
        %s340 = smul.addr %s339, 8
        %s341 = scalar_lea.vmem [#allocation7], %s340
        %s342 = sand.u32 %s128, 1
        %s343 = scalar_lea.sflag [#allocation9], %s342
        %s344 = sand.u32 %s128, 1
        %s345 = smul.addr %s344, 8
        %s346 = scalar_lea.vmem [#allocation8], %s345
        // Predicated region
        $region41: #{multi_single_input_forward.1} parent=31 // pred_check
          %p347 = pneg %p112
        $region42: #{multi_single_input_forward.1} parent=31 // pred_check_branch
          %349 = sbr.rel (%p347) target = $region44
        $region43: #{multi_single_input_forward.1} parent=31 // pred_region
          %s351 = ssub.s32 128, 128
          %352 = vsyncadd %s338, %s351
          %s353 = smul.addr %s26, 128
          %s354 = scalar_lea.hbm %s3, %s353
          %s356 = sshll.u32 %s341, 4
          %s357 = int_to_ptr.vmem [resolvable:$true] %s356
          %359 = dma.vmem_to_hbm [thread:$0]  %s357, 128, %s354, %s338
        $region44: #{multi_single_input_forward.1} parent=31 // pred_fallthru
          _
        // Predicated region
        $region45: #{multi_single_input_forward.1} parent=31 // pred_check
          %p360 = pneg %p138
        $region46: #{multi_single_input_forward.1} parent=31 // pred_check_branch
          %362 = sbr.rel (%p360) target = $region48
        $region47: #{multi_single_input_forward.1} parent=31 // pred_region
          %s364 = ssub.s32 128, 128
          %365 = vsyncadd %s343, %s364
          %s366 = smul.addr %s26, 128
          %s367 = scalar_lea.hbm %s4, %s366
          %s369 = sshll.u32 %s346, 4
          %s370 = int_to_ptr.vmem [resolvable:$true] %s369
          %372 = dma.vmem_to_hbm [thread:$0]  %s370, 128, %s367, %s343
        $region48: #{multi_single_input_forward.1} parent=31 // pred_fallthru
          _
      $region32: #{multi_single_input_forward.1} parent=5 // pred_fallthru
        _
      %p373 = scmp.le.s32.totalorder 2, %s21
      // Predicated region
      $region49: #{multi_single_input_forward.1} parent=5 // pred_check
        %p374 = pneg %p373
      $region50: #{multi_single_input_forward.1} parent=5 // pred_check_branch
        %376 = sbr.rel (%p374) target = $region52
      $region51: #{multi_single_input_forward.1} parent=5 // pred_region
        %s377 = ssub.s32 %s21, 2
        // Predicated region
        $region53: #{multi_single_input_forward.1} parent=51 // pred_check
          %p378 = pneg %p118
        $region54: #{multi_single_input_forward.1} parent=51 // pred_check_branch
          %380 = sbr.rel (%p378) target = $region56
        $region55: #{multi_single_input_forward.1} parent=51 // pred_region
          %s381 = sand.u32 %s103, 1
          %s382 = scalar_lea.sflag [#allocation4], %s381
          %s383 = sand.u32 %s103, 1
          %s384 = smul.addr %s383, 8
          %s385 = scalar_lea.vmem [#allocation7], %s384
          %386 = dma.done %s382, 128
        $region56: #{multi_single_input_forward.1} parent=51 // pred_fallthru
          _
        // Predicated region
        $region57: #{multi_single_input_forward.1} parent=51 // pred_check
          %p387 = pneg %p144
        $region58: #{multi_single_input_forward.1} parent=51 // pred_check_branch
          %389 = sbr.rel (%p387) target = $region60
        $region59: #{multi_single_input_forward.1} parent=51 // pred_region
          %s390 = sand.u32 %s129, 1
          %s391 = scalar_lea.sflag [#allocation9], %s390
          %s392 = sand.u32 %s129, 1
          %s393 = smul.addr %s392, 8
          %s394 = scalar_lea.vmem [#allocation8], %s393
          %395 = dma.done %s391, 128
        $region60: #{multi_single_input_forward.1} parent=51 // pred_fallthru
          _
      $region52: #{multi_single_input_forward.1} parent=5 // pred_fallthru
        _
    $region6: #{multi_single_input_forward.1} parent=1 // loop_footer
      %s25 = sadd.s32 1, %s21
    $region7: #{multi_single_input_forward.1} parent=1 // loop_footer_branch
      %20 = sbr.rel target = $region3
    $region8: #{multi_single_input_forward.1} parent=1 // loop_exit
      _
    %396 = vsyncpa [#allocation3], 1
    %s397 = scalar_lea.sflag [#allocation3], 1
    %398 = vsyncpa %s397, 1
    %399 = vsyncpa [#allocation6], 1
    %400 = vsyncpa [#allocation4], 1
    %s401 = scalar_lea.sflag [#allocation4], 1
    %402 = vsyncpa %s401, 1
    %403 = vsyncpa [#allocation9], 1
    %s404 = scalar_lea.sflag [#allocation9], 1
    %405 = vsyncpa %s404, 1

</llo_original>
